<compile_context>
chip_gen: v7x
topology: tpu7x:2x2x1
jax: 0.10.0
libtpu: 0.0.40
codegen_flags: <defaults>
</compile_context>

<pallas_src>
import jax
import jax.numpy as jnp
from jax.experimental import pallas as pl
from jax.experimental.pallas import tpu as pltpu


# ----------------------------------------------------------------------------
# Primary path: direct HBM -> HBM async-DMA copy (shape-agnostic, no VMEM).
# ----------------------------------------------------------------------------
def _chunk_bounds(x, *, max_chunks=4, min_chunk_bytes=256 * 1024):
    """Static (start, size) ranges along axis 0; [(0, None)] = one whole-array DMA."""
    nbytes = x.size * x.dtype.itemsize
    if x.ndim == 0 or (x.ndim >= 1 and x.shape[0] < 2) or nbytes < 2 * min_chunk_bytes:
        return [(0, None)]
    n = min(max_chunks, x.shape[0], max(1, nbytes // min_chunk_bytes))
    if n < 2:
        return [(0, None)]
    base, rem = divmod(x.shape[0], n)
    bounds, start = [], 0
    for i in range(n):
        size = base + (1 if i < rem else 0)
        bounds.append((start, size))
        start += size
    return bounds


def _make_dma_copy_kernel(chunk_bounds):
    n = len(chunk_bounds)

    def kernel(x_hbm, o_hbm):
        def body(*sems):
            copies = []
            for (start, size), sem in zip(chunk_bounds, sems):
                if size is None:
                    cp = pltpu.make_async_copy(x_hbm, o_hbm, sem)
                else:
                    cp = pltpu.make_async_copy(
                        x_hbm.at[pl.ds(start, size)],
                        o_hbm.at[pl.ds(start, size)],
                        sem)
                cp.start()
                copies.append(cp)
            for cp in copies:
                cp.wait()

        pl.run_scoped(body, *([pltpu.SemaphoreType.DMA] * n))

    return kernel


def tree_forward(x: jax.Array) -> jax.Array:
    """forward(x) = x as one (or a few concurrent) direct HBM->HBM DMAs."""
    bounds = _chunk_bounds(x)
    nbytes = x.size * x.dtype.itemsize
    return pl.pallas_call(
        _make_dma_copy_kernel(bounds),
        out_shape=jax.ShapeDtypeStruct(x.shape, x.dtype),
        in_specs=[pl.BlockSpec(memory_space=pl.ANY)],   # stay in HBM, no auto-DMA
        out_specs=pl.BlockSpec(memory_space=pl.ANY),
        cost_estimate=pl.CostEstimate(
            flops=0, transcendentals=0, bytes_accessed=2 * nbytes),
    )(x)


# ----------------------------------------------------------------------------
# Donation-only path: zero-copy identity via input/output aliasing.
# ----------------------------------------------------------------------------
def _alias_identity_kernel(x_ref, o_ref, flag_smem):
    # Output buffer IS the input buffer (input_output_aliases={0: 0}); nothing
    # to move and nothing to compute.  A 1-element SMEM store keeps the kernel
    # body non-empty without touching HBM (pltpu.touch is not usable here).
    del x_ref, o_ref
    flag_smem[0] = jnp.int32(1)


def tree_forward_donated(x: jax.Array) -> jax.Array:
    """Zero-HBM-traffic identity.

    Only truly zero-copy when the caller donates `x` at the jit boundary
    (jax.jit(..., donate_argnums=...)).  Without donation, XLA inserts a
    defensive copy of x to satisfy the alias — prefer `tree_forward` then.
    """
    return pl.pallas_call(
        _alias_identity_kernel,
        out_shape=jax.ShapeDtypeStruct(x.shape, x.dtype),
        in_specs=[pl.BlockSpec(memory_space=pl.ANY)],
        out_specs=pl.BlockSpec(memory_space=pl.ANY),
        scratch_shapes=[pltpu.SMEM((1,), jnp.int32)],
        input_output_aliases={0: 0},
    )(x)


# ----------------------------------------------------------------------------
# Alternate path: tiled VMEM streaming copy (lane-dense, pipelined).
# ----------------------------------------------------------------------------
_SUBLANE_MULTIPLE = {4: 8, 2: 16, 1: 32}   # f32 / bf16 / int8-fp8 sublane packing


def _vmem_copy_kernel(x_ref, o_ref):
    o_ref[...] = x_ref[...]


def tree_forward_tiled(x: jax.Array, *, block_bytes: int = 2 * 1024 * 1024) -> jax.Array:
    """forward(x) = x as a lane-dense tiled HBM->VMEM->HBM streaming copy."""
    total = x.size
    itemsize = x.dtype.itemsize
    sub = _SUBLANE_MULTIPLE.get(itemsize, 8)

    # Lane-dense 2D view: widest last dim (multiple of 128) whose row count is
    # also a multiple of the packed-sublane count when possible.
    lanes = 0
    for cand in (2048, 1024, 512, 256, 128):
        if total % cand == 0 and (total // cand) % sub == 0:
            lanes = cand
            break
    if lanes == 0:
        for cand in (2048, 1024, 512, 256, 128):
            if total % cand == 0:
                lanes = cand
                break
    if lanes == 0:
        # Does not factor into full 128-lane rows: route to the shape-agnostic
        # HBM->HBM DMA copy (never to the aliased path — caller wants a copy).
        return tree_forward(x)

    rows = total // lanes
    x2 = x.reshape(rows, lanes)
    bytes_per_row = lanes * itemsize

    if rows <= sub:
        row_block = rows                                   # full extent: always legal
    else:
        row_block = min(rows, max(1, block_bytes // bytes_per_row))
        row_block = max(sub, (row_block // sub) * sub)     # unmasked packed stores
        # Keep >= 2 grid steps so v7x's two TensorCores both stream.
        half = ((rows + 1) // 2 + sub - 1) // sub * sub
        row_block = min(row_block, half)

    grid = (pl.cdiv(rows, row_block),)                     # ragged last block is legal
    out = pl.pallas_call(
        _vmem_copy_kernel,
        out_shape=jax.ShapeDtypeStruct((rows, lanes), x.dtype),
        grid=grid,
        in_specs=[pl.BlockSpec((row_block, lanes), lambda i: (i, 0))],
        out_specs=pl.BlockSpec((row_block, lanes), lambda i: (i, 0)),
        compiler_params=pltpu.CompilerParams(
            dimension_semantics=("parallel",),             # shards across v7x's 2 TCs
            vmem_limit_bytes=32 * 1024 * 1024,             # safe on v5e/v6e/v7x
        ),
        cost_estimate=pl.CostEstimate(
            flops=0, transcendentals=0, bytes_accessed=2 * total * itemsize),
    )(x2)
    return out.reshape(x.shape)


if __name__ == "__main__":
    key = jax.random.PRNGKey(0)
    k1, k2, k3 = jax.random.split(key, 3)

    # Shape implied by Tree's NCHW forward (batch=2, channels=4, spatial=16).
    x = jax.random.normal(k1, (2, 4, 16, 16), dtype=jnp.float32)

    # 1) Primary path: single HBM->HBM DMA copy.
    y = tree_forward(x)
    jax.block_until_ready(y)
    assert y.shape == x.shape and y.dtype == x.dtype
    assert bool(jnp.all(y == x))

    # 2) Shape-agnostic: odd shapes need no 128-lane factoring.
    x_odd = jax.random.normal(k2, (3, 7, 5), dtype=jnp.float32)
    y_odd = tree_forward(x_odd)
    jax.block_until_ready(y_odd)
    assert bool(jnp.all(y_odd == x_odd))

    # 3) Large enough to split into concurrent per-chunk DMAs.
    x_big = jax.random.normal(k3, (8, 128, 256), dtype=jnp.float32)   # 1 MiB
    y_big = tree_forward(x_big)
    jax.block_until_ready(y_big)
    assert bool(jnp.all(y_big == x_big))

    # 4) Aliased zero-copy identity (zero HBM traffic only when x is donated).
    y_alias = tree_forward_donated(x)
    jax.block_until_ready(y_alias)
    assert y_alias.shape == x.shape and y_alias.dtype == x.dtype
    assert bool(jnp.all(y_alias == x))

    # 5) Tiled VMEM streaming copy variant.
    y_tiled = tree_forward_tiled(x)
    jax.block_until_ready(y_tiled)
    assert bool(jnp.all(y_tiled == x))

    print("KERNEL_OK")
</pallas_src>

<mosaic_0001>
module attributes {stable_mosaic.version = 11 : i64} {
  func.func @kernel(%arg0: memref<2x4x16x16xf32, #tpu.memory_space<any>>, %arg1: memref<2x4x16x16xf32, #tpu.memory_space<any>>) attributes {dimension_semantics = [], scalar_prefetch = 0 : i64, scratch_operands = 0 : i64, tpu.core_type = #tpu.core_type<tc>} {
    "tpu.region"() ({
      %0 = tpu.sem_alloc : memref<!tpu.dma_semaphore, #tpu.memory_space<semaphore_mem>>
      tpu.enqueue_dma source(%arg0 : memref<2x4x16x16xf32, #tpu.memory_space<any>>) target(%arg1 : memref<2x4x16x16xf32, #tpu.memory_space<any>>) target_semaphore(%0 : memref<!tpu.dma_semaphore, #tpu.memory_space<semaphore_mem>>)
      tpu.wait_dma2 semaphore(%0 : memref<!tpu.dma_semaphore, #tpu.memory_space<semaphore_mem>>) src(%arg0 : memref<2x4x16x16xf32, #tpu.memory_space<any>>) dst(%arg1 : memref<2x4x16x16xf32, #tpu.memory_space<any>>)
      tpu.yield
    }) : () -> ()
    return
  }
}

</mosaic_0001>

<llo_original>
// kernel: tpu_custom_call.1
$region0: #{tpu_custom_call.1}
  #allocation0 [shape = 'u32[]', space=smem, size = 0x4, offset = 0x4, fixed_abs, tag = 'smem constant byte address 0x4 - core index']
  #allocation1 [shape = 'u32[144,128]{1,0:T(1,128)}', space=vmem, size = 0x12000, scoped, tag = 'internal scratch']
  #allocation3 [shape = 's32[]', space=sflag, size = 0x4, offset = 0, fixed_abs, tag = 'sflag constant byte address 0x0 - dummy sync flag']
  #allocation4 [shape = 'u32[0]{0}', space=smem, size = 0, offset = 0, fixed_abs, tag = 'smem constant byte address 0x0 - null']
  %s0 = inlined_call_operand.hbm [shape: f32[2,4,16,16], index: 0, kind: input, shape index: {}]
  %s1 = inlined_call_operand.hbm [shape: f32[2,4,16,16], index: 1, kind: output, shape index: {}]
  %s2 = sld [smem:[#allocation0]]
  $region3: #{tpu_custom_call.1} parent=0
    _
  %s4 = ssub.s32 1, %s2
  %s5 = scalar_select 0, %s4, %s2
  $region2: #{tpu_custom_call.1} parent=0
    #allocation2 [shape = 's32[1]{0}', space=sflag, size = 0x4, scoped, tag = 'scoped memory for tpu_custom_call.1']
    %s7 = sshll.u32 1, 14
    %s8 = sxor.u32 4294967295, %s7
    %s11 = sshll.u32 3, 24
    %s12 = sxor.u32 4294967295, %s11
    %s13 = sand.u32 0, %s12
    %s15 = sor.u32 %s13, 0
    %18 = dma.general %s0, 2048, %s1, [#allocation2], [#allocation3], [#allocation4], %s15, 0
    %s19 = smul.u32 2, 4
    %s20 = smul.u32 %s19, 16
    %s21 = smul.u32 %s20, 1
    %s22 = sshll.u32 %s21, 4
    %23 = dma.done [#allocation2], %s22

</llo_original>
